<compile_context>
chip_gen: v5e
topology: v5e:2x2
jax: 0.10.0
libtpu: 0.0.40
codegen_flags: <defaults>
</compile_context>

<pallas_src>
import functools
import numpy as np
import jax
import jax.numpy as jnp
from jax.experimental import pallas as pl
from jax.experimental.pallas import tpu as pltpu


def _round_up(x, m):
    return ((x + m - 1) // m) * m


def _divisors_128(d):
    return [v for v in range(128, d + 1, 128) if d % v == 0]


def _choose_tiles(din_p, dout_p, slab_bytes_per_el,
                  slab_budget_bytes=24 * 1024 * 1024):
    """Pick (tk, tn) as 128-multiple divisors of the padded dims.

    Preferences:
      * tk as large as possible (ideally the whole reduction) -> fewest steps.
      * >=2 Dout tiles when a divisor allows it (gives v7x's second TensorCore
        work) as long as the per-step slab DMA stays >= ~256 KiB.
      * 2 slabs x 2 pipeline buffers x tile stays under slab_budget_bytes
        (v7x has only 64 MiB physical VMEM; v5e/v6e have 128 MiB).
    """
    def fits(tk, tn):
        return 2 * 2 * tk * tn * slab_bytes_per_el <= slab_budget_bytes

    for tk in reversed(_divisors_128(din_p)):          # largest tk first
        tn_all = [tn for tn in _divisors_128(dout_p) if fits(tk, tn)]
        if not tn_all:
            continue
        tn_multi = [tn for tn in tn_all
                    if dout_p // tn >= 2
                    and tk * tn * slab_bytes_per_el >= 256 * 1024]
        tn = max(tn_multi) if tn_multi else max(tn_all)
        return tk, tn
    return 128, 128


def prepare_pw_linear_params(w_const, b_const, *, param_dtype=jnp.bfloat16):
    """One-time (init-time) preprocessing of the PWNet parameter slabs.

    Pads Din/Dout to multiples of 128 (lane-dense, unmasked MXU/store path) and
    casts to bf16 so the kernel streams half the HBM bytes.  Runs once at
    module-construction time, NOT in the per-call hot path.
    """
    K, Din, Dout = w_const.shape
    din_p, dout_p = _round_up(Din, 128), _round_up(Dout, 128)
    w_p = jnp.pad(w_const.astype(param_dtype),
                  ((0, 0), (0, din_p - Din), (0, dout_p - Dout)))
    b_p = jnp.pad(b_const.astype(param_dtype),
                  ((0, 0), (0, dout_p - Dout))).reshape(K, 1, dout_p)
    return {"w": w_p, "b": b_p, "K": K, "Din": Din, "Dout": Dout,
            "Din_p": din_p, "Dout_p": dout_p}


def _pw_linear_kernel(tk, idx_ref, dist_ref, x_ref, wl_ref, wr_ref,
                      bl_ref, br_ref, o_ref, acc_ref):
    # idx_ref (scalar prefetch, SMEM) is consumed only by the BlockSpec index_maps.
    del idx_ref
    k = pl.program_id(1)
    d = dist_ref[0]                                    # f32 scalar from SMEM

    @pl.when(k == 0)
    def _():
        acc_ref[...] = jnp.zeros_like(acc_ref)

    # x stays VMEM-resident across the whole grid; slice the current k-chunk.
    off = pl.multiple_of(k * tk, 128)
    x_blk = x_ref[:, pl.ds(off, tk)]                   # [B_p, tk] bf16

    # Blend the matmul OUTPUTS (not the weights): bf16 slabs go straight to the
    # MXU, no [tk, tn] f32 temp, and the scalar blend touches only [B_p, tn].
    acc_ref[...] += (
        d * jnp.dot(x_blk, wl_ref[...], preferred_element_type=jnp.float32)
        + (1.0 - d) * jnp.dot(x_blk, wr_ref[...], preferred_element_type=jnp.float32))

    @pl.when(k == pl.num_programs(1) - 1)
    def _():
        b = (d * bl_ref[...].astype(jnp.float32)
             + (1.0 - d) * br_ref[...].astype(jnp.float32))        # [1, tn]
        o_ref[...] = (acc_ref[...] + b).astype(o_ref.dtype)


def pw_linear(x, lam, params, pivots):
    """x: [B, Din]; params from prepare_pw_linear_params; pivots: [K].

    Returns out[B, Dout] = x @ weight(lam) + bias(lam), with weight/bias
    piecewise-linearly interpolated between the two neighbouring slabs.
    """
    w_p, b_p = params["w"], params["b"]
    K = params["K"]
    Din, Dout = params["Din"], params["Dout"]
    din_p, dout_p = params["Din_p"], params["Dout_p"]
    B = x.shape[0]
    assert K >= 2, "PWNet interpolation needs kernel_num >= 2."

    # ---- scalar piecewise-linear bookkeeping (matches PWNet.forward) ----
    lam_ = jnp.float32(lam) * jnp.float32(0.99999)
    left = jnp.floor(lam_ * (K - 1)).astype(jnp.int32)
    left = jnp.clip(left, 0, K - 2)      # guard: no OOB slab DMA for lam outside [0,1)
    right = left + 1
    pv = pivots.astype(jnp.float32)
    dist = (pv[right] - lam_) / (pv[right] - pv[left])
    idx = jnp.stack([left, right]).astype(jnp.int32)         # (2,) scalar prefetch
    dist_arr = jnp.reshape(dist, (1,)).astype(jnp.float32)   # (1,)  SMEM scalar

    # ---- x: tiny per-call pad + bf16 cast (kept VMEM-resident by the kernel) ----
    B_p = _round_up(B, 16)                                   # 16: bf16 sublane packing
    x_p = jnp.pad(x.astype(jnp.bfloat16), ((0, B_p - B), (0, din_p - Din)))

    tk, tn = _choose_tiles(din_p, dout_p, w_p.dtype.itemsize)
    grid = (dout_p // tn, din_p // tk)       # reduction (Din) axis last

    # Explicit VMEM budget (stay well under v7x's 64 MiB physical VMEM).
    est = (2 * 2 * (tk * tn + tn) * w_p.dtype.itemsize       # slabs+bias, double-buffered
           + 2 * B_p * din_p * 2                              # resident x (bf16)
           + B_p * tn * 4                                     # f32 accumulator
           + 2 * B_p * tn * 4)                                # output double buffer
    vmem_limit = int(np.clip(2 * est, 16 * 1024 * 1024, 48 * 1024 * 1024))

    grid_spec = pltpu.PrefetchScalarGridSpec(
        num_scalar_prefetch=1,
        grid=grid,
        in_specs=[
            # dist scalar lives in SMEM: no padded VMEM tile / DMA.
            pl.BlockSpec(memory_space=pltpu.MemorySpace.SMEM),
            # x: single VMEM-resident block, fetched once for the whole grid.
            pl.BlockSpec((B_p, din_p), lambda j, k, sidx: (0, 0)),
            # weight slab tiles selected data-dependently via the prefetched
            # indices; the size-1 K dim is squeezed (kernel sees [tk, tn]).
            pl.BlockSpec((None, tk, tn), lambda j, k, sidx: (sidx[0], k, j)),
            pl.BlockSpec((None, tk, tn), lambda j, k, sidx: (sidx[1], k, j)),
            # bias slab tiles: kernel sees [1, tn].
            pl.BlockSpec((None, 1, tn), lambda j, k, sidx: (sidx[0], 0, j)),
            pl.BlockSpec((None, 1, tn), lambda j, k, sidx: (sidx[1], 0, j)),
        ],
        out_specs=pl.BlockSpec((B_p, tn), lambda j, k, sidx: (0, j)),
        scratch_shapes=[pltpu.VMEM((B_p, tn), jnp.float32)],
    )

    out_p = pl.pallas_call(
        functools.partial(_pw_linear_kernel, tk),
        out_shape=jax.ShapeDtypeStruct((B_p, dout_p), jnp.float32),
        grid_spec=grid_spec,
        compiler_params=pltpu.CompilerParams(
            dimension_semantics=("parallel", "arbitrary"),
            vmem_limit_bytes=vmem_limit,
        ),
    )(idx, dist_arr, x_p, w_p, w_p, b_p, b_p)

    return out_p[:B, :Dout]


def pw_linear_ref(x, lam, params, pivots):
    """Pure-JAX reference mirroring the PyTorch forward on the SAME stored
    (bf16) parameters, so kernel vs ref differ only in blend/accumulation order."""
    K, Din, Dout = params["K"], params["Din"], params["Dout"]
    w = params["w"].astype(jnp.float32)[:, :Din, :Dout]
    b = params["b"].astype(jnp.float32)[:, 0, :Dout]
    lam_ = jnp.float32(lam) * jnp.float32(0.99999)
    left = jnp.clip(jnp.floor(lam_ * (K - 1)).astype(jnp.int32), 0, K - 2)
    right = left + 1
    pv = pivots.astype(jnp.float32)
    dist = (pv[right] - lam_) / (pv[right] - pv[left])
    wi = w[left] * dist + (1.0 - dist) * w[right]
    bi = b[left] * dist + (1.0 - dist) * b[right]
    xb = x.astype(jnp.bfloat16).astype(jnp.float32)
    return jnp.matmul(xb, wi, precision=jax.lax.Precision.HIGHEST) + bi


if __name__ == "__main__":
    key = jax.random.PRNGKey(0)
    keys = jax.random.split(key, 6)

    def run_case(B, Din, Dout, K, lam_val, case_keys):
        k_x, k_w, k_b = case_keys
        x = jax.random.normal(k_x, (B, Din), dtype=jnp.float32)
        # Deterministic stand-ins for kaiming_uniform_ / randn parameter init.
        bound = 1.0 / float(np.sqrt(Din))
        w_const = jax.random.uniform(k_w, (K, Din, Dout), jnp.float32, -bound, bound)
        b_const = jax.random.normal(k_b, (K, Dout), dtype=jnp.float32)
        pivots = jnp.linspace(0.0, 1.0, K).astype(jnp.float32)

        params = prepare_pw_linear_params(w_const, b_const)   # one-time, off hot path
        out = jax.block_until_ready(
            pw_linear(x, jnp.float32(lam_val), params, pivots))
        ref = pw_linear_ref(x, jnp.float32(lam_val), params, pivots)
        np.testing.assert_allclose(np.asarray(out), np.asarray(ref),
                                   rtol=2e-3, atol=2e-3)

    # Small shapes consistent with PWLinear(size=(Din, Dout), kernel_num=K).
    run_case(B=8, Din=32, Dout=16, K=4, lam_val=0.37, case_keys=keys[:3])
    # Larger case exercising the multi-tile (parallel Dout) grid and the
    # data-dependent slab selection in a different pivot segment.
    run_case(B=16, Din=1152, Dout=640, K=5, lam_val=0.73, case_keys=keys[3:])

    print("KERNEL_OK")
</pallas_src>

<mosaic_0001>
module attributes {stable_mosaic.version = 11 : i64} {
  func.func @_pw_linear_kernel(%arg0: i32, %arg1: i32, %arg2: memref<2xi32, #tpu.memory_space<smem>>, %arg3: memref<1xf32, #tpu.memory_space<smem>>, %arg4: memref<16x128xbf16, #tpu.memory_space<vmem>>, %arg5: memref<1x128x128xbf16, #tpu.memory_space<vmem>>, %arg6: memref<1x128x128xbf16, #tpu.memory_space<vmem>>, %arg7: memref<1x1x128xbf16, #tpu.memory_space<vmem>>, %arg8: memref<1x1x128xbf16, #tpu.memory_space<vmem>>, %arg9: memref<16x128xf32, #tpu.memory_space<vmem>>, %arg10: memref<16x128xf32, #tpu.memory_space<vmem>>) attributes {dimension_semantics = [#tpu.dimension_semantics<parallel>, #tpu.dimension_semantics<arbitrary>], iteration_bounds = array<i64: 1, 1>, scalar_prefetch = 1 : i64, scratch_operands = 1 : i64, tpu.core_type = #tpu.core_type<tc>, window_params = [{transform_indices = @transform_0, window_bounds = array<i64: 1>}, {pipeline_mode = #tpu.pipeline_mode<synchronous>, transform_indices = @transform_1, window_bounds = array<i64: 16, 128>}, {transform_indices = @transform_2, window_bounds = array<i64: 1, 128, 128>}, {transform_indices = @transform_3, window_bounds = array<i64: 1, 128, 128>}, {transform_indices = @transform_4, window_bounds = array<i64: 1, 1, 128>}, {transform_indices = @transform_5, window_bounds = array<i64: 1, 1, 128>}, {transform_indices = @transform_6, window_bounds = array<i64: 16, 128>}]} {
    %c0 = arith.constant 0 : index
    %0 = memref.load %arg3[%c0] : memref<1xf32, #tpu.memory_space<smem>>
    %c0_i32 = arith.constant 0 : i32
    %1 = arith.cmpi eq, %arg1, %c0_i32 : i32
    %2 = arith.extui %1 : i1 to i32
    %c0_i32_0 = arith.constant 0 : i32
    %3 = arith.cmpi ne, %2, %c0_i32_0 : i32
    scf.if %3 {
      %cst_16 = arith.constant 0.000000e+00 : f32
      %26 = vector.broadcast %cst_16 : f32 to vector<16x128xf32>
      %c0_17 = arith.constant 0 : index
      %c0_18 = arith.constant 0 : index
      %27 = vector.load %arg10[%c0_17, %c0_18] : memref<16x128xf32, #tpu.memory_space<vmem>>, vector<16x128xf32>
      tpu.vector_store %arg10[%c0_17, %c0_18], %26 {strides = array<i32>} : memref<16x128xf32, #tpu.memory_space<vmem>>, vector<16x128xf32>,
    } else {
    }
    %c128_i32 = arith.constant 128 : i32
    %4 = arith.muli %arg1, %c128_i32 : i32
    %5 = tpu.assume_multiple %4, 128 : i32
    %c0_1 = arith.constant 0 : index
    %6 = arith.index_cast %5 : i32 to index
    %7 = vector.load %arg4[%c0_1, %6] : memref<16x128xbf16, #tpu.memory_space<vmem>>, vector<16x128xbf16>
    %c0_2 = arith.constant 0 : index
    %c0_3 = arith.constant 0 : index
    %8 = vector.load %arg10[%c0_2, %c0_3] : memref<16x128xf32, #tpu.memory_space<vmem>>, vector<16x128xf32>
    %c0_4 = arith.constant 0 : index
    %c0_5 = arith.constant 0 : index
    %c0_6 = arith.constant 0 : index
    %9 = vector.load %arg5[%c0_4, %c0_5, %c0_6] : memref<1x128x128xbf16, #tpu.memory_space<vmem>>, vector<1x128x128xbf16>
    %10 = vector.shape_cast %9 : vector<1x128x128xbf16> to vector<128x128xbf16>
    %cst = arith.constant dense<0.000000e+00> : vector<16x128xf32>
    %11 = tpu.matmul %7, %10, %cst {dimension_numbers = #tpu.dot_dimension_numbers<[1], [0], [0], [1], [0, 0, 1, 1], [], []>} : vector<16x128xbf16>, vector<128x128xbf16>, vector<16x128xf32> -> vector<16x128xf32>
    %12 = vector.broadcast %0 : f32 to vector<16x128xf32>
    %13 = arith.mulf %12, %11 : vector<16x128xf32>
    %cst_7 = arith.constant 1.000000e+00 : f32
    %14 = arith.subf %cst_7, %0 : f32
    %c0_8 = arith.constant 0 : index
    %c0_9 = arith.constant 0 : index
    %c0_10 = arith.constant 0 : index
    %15 = vector.load %arg6[%c0_8, %c0_9, %c0_10] : memref<1x128x128xbf16, #tpu.memory_space<vmem>>, vector<1x128x128xbf16>
    %16 = vector.shape_cast %15 : vector<1x128x128xbf16> to vector<128x128xbf16>
    %cst_11 = arith.constant dense<0.000000e+00> : vector<16x128xf32>
    %17 = tpu.matmul %7, %16, %cst_11 {dimension_numbers = #tpu.dot_dimension_numbers<[1], [0], [0], [1], [0, 0, 1, 1], [], []>} : vector<16x128xbf16>, vector<128x128xbf16>, vector<16x128xf32> -> vector<16x128xf32>
    %18 = vector.broadcast %14 : f32 to vector<16x128xf32>
    %19 = arith.mulf %18, %17 : vector<16x128xf32>
    %20 = arith.addf %13, %19 : vector<16x128xf32>
    %21 = arith.addf %8, %20 : vector<16x128xf32>
    %c0_12 = arith.constant 0 : index
    %c0_13 = arith.constant 0 : index
    %22 = vector.load %arg10[%c0_12, %c0_13] : memref<16x128xf32, #tpu.memory_space<vmem>>, vector<16x128xf32>
    tpu.vector_store %arg10[%c0_12, %c0_13], %21 {strides = array<i32>} : memref<16x128xf32, #tpu.memory_space<vmem>>, vector<16x128xf32>,
    %c0_i32_14 = arith.constant 0 : i32
    %23 = arith.cmpi eq, %arg1, %c0_i32_14 : i32
    %24 = arith.extui %23 : i1 to i32
    %c0_i32_15 = arith.constant 0 : i32
    %25 = arith.cmpi ne, %24, %c0_i32_15 : i32
    scf.if %25 {
      %c0_16 = arith.constant 0 : index
      %c0_17 = arith.constant 0 : index
      %c0_18 = arith.constant 0 : index
      %26 = vector.load %arg7[%c0_16, %c0_17, %c0_18] : memref<1x1x128xbf16, #tpu.memory_space<vmem>>, vector<1x1x128xbf16>
      %27 = vector.shape_cast %26 : vector<1x1x128xbf16> to vector<1x128xbf16>
      %28 = arith.extf %27 : vector<1x128xbf16> to vector<1x128xf32>
      %29 = vector.broadcast %0 : f32 to vector<1x128xf32>
      %30 = arith.mulf %29, %28 : vector<1x128xf32>
      %cst_19 = arith.constant 1.000000e+00 : f32
      %31 = arith.subf %cst_19, %0 : f32
      %c0_20 = arith.constant 0 : index
      %c0_21 = arith.constant 0 : index
      %c0_22 = arith.constant 0 : index
      %32 = vector.load %arg8[%c0_20, %c0_21, %c0_22] : memref<1x1x128xbf16, #tpu.memory_space<vmem>>, vector<1x1x128xbf16>
      %33 = vector.shape_cast %32 : vector<1x1x128xbf16> to vector<1x128xbf16>
      %34 = arith.extf %33 : vector<1x128xbf16> to vector<1x128xf32>
      %35 = vector.broadcast %31 : f32 to vector<1x128xf32>
      %36 = arith.mulf %35, %34 : vector<1x128xf32>
      %37 = arith.addf %30, %36 : vector<1x128xf32>
      %c0_23 = arith.constant 0 : index
      %c0_24 = arith.constant 0 : index
      %38 = vector.load %arg10[%c0_23, %c0_24] : memref<16x128xf32, #tpu.memory_space<vmem>>, vector<16x128xf32>
      %39 = vector.broadcast %37 : vector<1x128xf32> to vector<16x128xf32>
      %40 = arith.addf %38, %39 : vector<16x128xf32>
      %c0_25 = arith.constant 0 : index
      %c0_26 = arith.constant 0 : index
      %41 = vector.load %arg9[%c0_25, %c0_26] : memref<16x128xf32, #tpu.memory_space<vmem>>, vector<16x128xf32>
      tpu.vector_store %arg9[%c0_25, %c0_26], %40 {strides = array<i32>} : memref<16x128xf32, #tpu.memory_space<vmem>>, vector<16x128xf32>,
    } else {
    }
    return
  }
  func.func @transform_0(%arg0: i32, %arg1: i32, %arg2: memref<2xi32, #tpu.memory_space<smem>>) -> i32 {
    %c0_i32 = arith.constant 0 : i32
    %c0_i32_0 = arith.constant 0 : i32
    return %c0_i32 : i32
  }
  func.func @transform_1(%arg0: i32, %arg1: i32, %arg2: memref<2xi32, #tpu.memory_space<smem>>) -> (i32, i32) {
    %c0_i32 = arith.constant 0 : i32
    %c0_i32_0 = arith.constant 0 : i32
    %c0_i32_1 = arith.constant 0 : i32
    return %c0_i32, %c0_i32_0 : i32, i32
  }
  func.func @transform_2(%arg0: i32, %arg1: i32, %arg2: memref<2xi32, #tpu.memory_space<smem>>) -> (i32, i32, i32) {
    %c0 = arith.constant 0 : index
    %0 = memref.load %arg2[%c0] : memref<2xi32, #tpu.memory_space<smem>>
    %c0_i32 = arith.constant 0 : i32
    return %0, %arg1, %arg0 : i32, i32, i32
  }
  func.func @transform_3(%arg0: i32, %arg1: i32, %arg2: memref<2xi32, #tpu.memory_space<smem>>) -> (i32, i32, i32) {
    %c1 = arith.constant 1 : index
    %0 = memref.load %arg2[%c1] : memref<2xi32, #tpu.memory_space<smem>>
    %c0_i32 = arith.constant 0 : i32
    return %0, %arg1, %arg0 : i32, i32, i32
  }
  func.func @transform_4(%arg0: i32, %arg1: i32, %arg2: memref<2xi32, #tpu.memory_space<smem>>) -> (i32, i32, i32) {
    %c0 = arith.constant 0 : index
    %0 = memref.load %arg2[%c0] : memref<2xi32, #tpu.memory_space<smem>>
    %c0_i32 = arith.constant 0 : i32
    %c0_i32_0 = arith.constant 0 : i32
    return %0, %c0_i32, %arg0 : i32, i32, i32
  }
  func.func @transform_5(%arg0: i32, %arg1: i32, %arg2: memref<2xi32, #tpu.memory_space<smem>>) -> (i32, i32, i32) {
    %c1 = arith.constant 1 : index
    %0 = memref.load %arg2[%c1] : memref<2xi32, #tpu.memory_space<smem>>
    %c0_i32 = arith.constant 0 : i32
    %c0_i32_0 = arith.constant 0 : i32
    return %0, %c0_i32, %arg0 : i32, i32, i32
  }
  func.func @transform_6(%arg0: i32, %arg1: i32, %arg2: memref<2xi32, #tpu.memory_space<smem>>) -> (i32, i32) {
    %c0_i32 = arith.constant 0 : i32
    %c0_i32_0 = arith.constant 0 : i32
    return %c0_i32, %arg0 : i32, i32
  }
}

</mosaic_0001>

<llo_original>
// kernel: tpu_custom_call.1
$region0: #{tpu_custom_call.1}
  #allocation0 [shape = 'u32[]', space=smem, size = 0x4, offset = 0x4, fixed_abs, tag = 'smem constant byte address 0x4 - core index']
  #allocation1 [shape = 'u32[72,128]{1,0:T(1,128)}', space=vmem, size = 0x9000, scoped, tag = 'internal scratch']
  #allocation2 [shape = 'f32[16,128]{1,0:T(8,128)}', space=vmem, size = 0x2000, scoped, tag = 'scratch operand']
  #allocation3 [shape = 's32[1]{0}', space=sflag, size = 0x4, scoped, tag = 'scoped memory for tpu_custom_call.1']
  #allocation4 [shape = 'u8[512]{0}', space=smem, size = 0x200, scoped, tag = 'prefetched SMEM operand 0']
  #allocation5 [shape = 'f32[1]{0:T(128)S(6)}', space=smem, size = 0x200, scoped, tag = 'scoped memory for tpu_custom_call.1']
  %s0 = inlined_call_operand.vmem [shape: s32[2], index: 0, kind: input, shape index: {}]
  %s1 = inlined_call_operand.<no memory space> [shape: f32[1], index: 1, kind: input, shape index: {}]
  %s2 = inlined_call_operand.vmem [shape: bf16[16,128], index: 2, kind: input, shape index: {}]
  %s3 = inlined_call_operand.hbm [shape: bf16[4,128,128], index: 3, kind: input, shape index: {}]
  %s4 = inlined_call_operand.hbm [shape: bf16[4,128,128], index: 4, kind: input, shape index: {}]
  %s5 = inlined_call_operand.vmem [shape: bf16[4,1,128], index: 5, kind: input, shape index: {}]
  %s6 = inlined_call_operand.vmem [shape: bf16[4,1,128], index: 6, kind: input, shape index: {}]
  %s7 = inlined_call_operand.hbm [shape: f32[16,128], index: 7, kind: output, shape index: {}]
  %s8 = sld [smem:[#allocation0]]
  $region50: #{tpu_custom_call.1} parent=0
    _
  %s10 = ssub.s32 1, %s8
  %s11 = scalar_select 0, %s10, %s8
  %s13 = sshll.u32 %s0, 4
  %s14 = int_to_ptr.vmem [resolvable:$true] %s13
  %16 = dma.vmem_to_smem %s14, 16, [#allocation4], [#allocation3]
  %17 = sst [smem:[#allocation5]] %s1
  %19 = dma.done [#allocation3], 16
  %20 = sfence
  $region1: #{tpu_custom_call.1} parent=0
    #allocation6 [shape = 'u8[32768]{0}', space=vmem, size = 0x8000, scoped, tag = 'input window, operand 3, single buffered']
    #allocation7 [shape = 's32[1]{0}', space=sflag, size = 0x4, scoped, tag = 'scoped memory for tpu_custom_call.1']
    #allocation8 [shape = 's32[1]{0}', space=sflag, size = 0x4, scoped, tag = 'scoped memory for tpu_custom_call.1']
    #allocation9 [shape = 'u8[32768]{0}', space=vmem, size = 0x8000, scoped, tag = 'input window, operand 4, single buffered']
    #allocation10 [shape = 's32[1]{0}', space=sflag, size = 0x4, scoped, tag = 'scoped memory for tpu_custom_call.1']
    #allocation11 [shape = 'u8[8192]{0}', space=vmem, size = 0x2000, scoped, tag = 'output window, operand 0, single buffered']
    %21 = vsyncpa [#allocation7], 0
    %22 = vsyncpa [#allocation10], 0
    %23 = vsyncpa [#allocation8], 0
    // Predicated region
    $region2: #{tpu_custom_call.1} parent=1 // pred_check
      _
    $region3: #{tpu_custom_call.1} parent=1 // pred_check_branch
      %25 = sbr.rel (0) target = $region5
    $region4: #{tpu_custom_call.1} parent=1 // pred_region
      _
    $region5: #{tpu_custom_call.1} parent=1 // pred_fallthru
      _
    // Predicated region
    $region6: #{tpu_custom_call.1} parent=1 // pred_check
      _
    $region7: #{tpu_custom_call.1} parent=1 // pred_check_branch
      %27 = sbr.rel (0) target = $region9
    $region8: #{tpu_custom_call.1} parent=1 // pred_region
      _
    $region9: #{tpu_custom_call.1} parent=1 // pred_fallthru
      _
    // Predicated region
    $region10: #{tpu_custom_call.1} parent=1 // pred_check
      _
    $region11: #{tpu_custom_call.1} parent=1 // pred_check_branch
      %29 = sbr.rel (0) target = $region13
    $region12: #{tpu_custom_call.1} parent=1 // pred_region
      %s30 = sld [smem:[#allocation4]]
      %32 = vsyncadd [#allocation7], 0
      %s33 = smul.addr %s30, 16
      %s34 = smul.addr %s33, 4
      %s35 = scalar_lea.hbm %s3, %s34
      %s36 = sshll.u32 %s35, 4
      %s37 = int_to_ptr.hbm [resolvable:$true] %s36
      %s38 = sshll.u32 [#allocation6], 4
      %s39 = int_to_ptr.vmem [resolvable:$true] %s38
      %44 = dma.hbm_to_vmem [thread:$0]  %s37, 1024, %s39, [#allocation7], 64, 64, 4
    $region13: #{tpu_custom_call.1} parent=1 // pred_fallthru
      _
    // Predicated region
    $region14: #{tpu_custom_call.1} parent=1 // pred_check
      _
    $region15: #{tpu_custom_call.1} parent=1 // pred_check_branch
      %46 = sbr.rel (0) target = $region17
    $region16: #{tpu_custom_call.1} parent=1 // pred_region
      %s47 = sld [smem:[#allocation4 + $0x1]]
      %49 = vsyncadd [#allocation10], 0
      %s50 = smul.addr %s47, 16
      %s51 = smul.addr %s50, 4
      %s52 = scalar_lea.hbm %s4, %s51
      %s53 = sshll.u32 %s52, 4
      %s54 = int_to_ptr.hbm [resolvable:$true] %s53
      %s55 = sshll.u32 [#allocation9], 4
      %s56 = int_to_ptr.vmem [resolvable:$true] %s55
      %61 = dma.hbm_to_vmem [thread:$0]  %s54, 1024, %s56, [#allocation10], 64, 64, 4
    $region17: #{tpu_custom_call.1} parent=1 // pred_fallthru
      _
    // Predicated region
    $region18: #{tpu_custom_call.1} parent=1 // pred_check
      _
    $region19: #{tpu_custom_call.1} parent=1 // pred_check_branch
      %63 = sbr.rel (0) target = $region21
    $region20: #{tpu_custom_call.1} parent=1 // pred_region
      %s64 = sld [smem:[#allocation4]]
      %p65 = scmp.lt.s32.totalorder %s64, 3
      %s66 = scalar_select %p65, %s64, 3
      %s67 = scalar_lea.vmem %s5, %s66
      %s68 = sld [smem:[#allocation4]]
    $region21: #{tpu_custom_call.1} parent=1 // pred_fallthru
      _
    // Predicated region
    $region22: #{tpu_custom_call.1} parent=1 // pred_check
      _
    $region23: #{tpu_custom_call.1} parent=1 // pred_check_branch
      %70 = sbr.rel (0) target = $region25
    $region24: #{tpu_custom_call.1} parent=1 // pred_region
      %s71 = sld [smem:[#allocation4 + $0x1]]
      %p72 = scmp.lt.s32.totalorder %s71, 3
      %s73 = scalar_select %p72, %s71, 3
      %s74 = scalar_lea.vmem %s6, %s73
      %s75 = sld [smem:[#allocation4 + $0x1]]
    $region25: #{tpu_custom_call.1} parent=1 // pred_fallthru
      _
    // Predicated region
    $region26: #{tpu_custom_call.1} parent=1 // pred_check
      _
    $region27: #{tpu_custom_call.1} parent=1 // pred_check_branch
      %77 = sbr.rel (0) target = $region29
    $region28: #{tpu_custom_call.1} parent=1 // pred_region
      %79 = dma.done [#allocation7], 1024
    $region29: #{tpu_custom_call.1} parent=1 // pred_fallthru
      _
    // Predicated region
    $region30: #{tpu_custom_call.1} parent=1 // pred_check
      _
    $region31: #{tpu_custom_call.1} parent=1 // pred_check_branch
      %81 = sbr.rel (0) target = $region33
    $region32: #{tpu_custom_call.1} parent=1 // pred_region
      %83 = dma.done [#allocation10], 1024
    $region33: #{tpu_custom_call.1} parent=1 // pred_fallthru
      _
    %s84 = sld [smem:[#allocation4]]
    %p85 = scmp.lt.s32.totalorder %s84, 3
    %s86 = scalar_select %p85, %s84, 3
    %s87 = scalar_lea.vmem %s5, %s86
    %s88 = sld [smem:[#allocation4 + $0x1]]
    %p89 = scmp.lt.s32.totalorder %s88, 3
    %s90 = scalar_select %p89, %s88, 3
    %s91 = scalar_lea.vmem %s6, %s90
    %s92 = sld [smem:[#allocation4]]
    %s93 = sld [smem:[#allocation4 + $0x1]]
    %s94 = sld [smem:[#allocation4]]
    %p95 = scmp.lt.s32.totalorder %s94, 3
    %s96 = scalar_select %p95, %s94, 3
    %s97 = scalar_lea.vmem %s5, %s96
    %s98 = sld [smem:[#allocation4]]
    %s99 = sld [smem:[#allocation4 + $0x1]]
    %p100 = scmp.lt.s32.totalorder %s99, 3
    %s101 = scalar_select %p100, %s99, 3
    %s102 = scalar_lea.vmem %s6, %s101
    %s103 = sld [smem:[#allocation4 + $0x1]]
    %s104 = sld [smem:[#allocation5]]
    %p105 = scmp.eq.s32.totalorder 0, 0
    // Predicated region
    $region34: #{tpu_custom_call.1} parent=1 // pred_check
      %p106 = pneg %p105
    $region35: #{tpu_custom_call.1} parent=1 // pred_check_branch
      %108 = sbr.rel (%p106) target = $region37
    $region36: #{tpu_custom_call.1} parent=1 // pred_region
      %109 = vst [vmem:[#allocation2] sm:$0xff] 0.0
      %110 = vst [vmem:[#allocation2 + $0x8] sm:$0xff] 0.0
    $region37: #{tpu_custom_call.1} parent=1 // pred_fallthru
      _
    %s111 = smul.u32 0, 128
    %s112 = sshra.s32 %s111, 7
    %s113 = sand.u32 %s111, 127
    %s114 = smul.addr %s112, 4
    %s115 = scalar_lea.vmem %s2, %s114
    %v116 = vld [vmem:[%s115] sm:$0xf]
    %v117 = vld [vmem:[%s115 + $0x4] sm:$0xf]
    %v118 = vld [vmem:[#allocation2] sm:$0xff]
    %v119 = vld [vmem:[#allocation2 + $0x8] sm:$0xff]
    %v120 = vld [vmem:[#allocation6] sm:$0xf]
    %v121 = vld [vmem:[#allocation6 + $0x4] sm:$0xf]
    %v122 = vld [vmem:[#allocation6 + $0x8] sm:$0xf]
    %v123 = vld [vmem:[#allocation6 + $0xc] sm:$0xf]
    %v124 = vld [vmem:[#allocation6 + $0x10] sm:$0xf]
    %v125 = vld [vmem:[#allocation6 + $0x14] sm:$0xf]
    %v126 = vld [vmem:[#allocation6 + $0x18] sm:$0xf]
    %v127 = vld [vmem:[#allocation6 + $0x1c] sm:$0xf]
    %v128 = vld [vmem:[#allocation6 + $0x20] sm:$0xf]
    %v129 = vld [vmem:[#allocation6 + $0x24] sm:$0xf]
    %v130 = vld [vmem:[#allocation6 + $0x28] sm:$0xf]
    %v131 = vld [vmem:[#allocation6 + $0x2c] sm:$0xf]
    %v132 = vld [vmem:[#allocation6 + $0x30] sm:$0xf]
    %v133 = vld [vmem:[#allocation6 + $0x34] sm:$0xf]
    %v134 = vld [vmem:[#allocation6 + $0x38] sm:$0xf]
    %v135 = vld [vmem:[#allocation6 + $0x3c] sm:$0xf]
    %v138 = vunpack.c.l.b16 %v116
    %v139 = vunpack.c.l.b16 %v117
    %v140 = vpack.c.b16 %v139, %v138
    %v158 = vunpack.c.l.b16 %v120
    %v159 = vunpack.c.l.b16 %v121
    %v160 = vunpack.c.l.b16 %v122
    %v161 = vunpack.c.l.b16 %v123
    %v162 = vunpack.c.l.b16 %v124
    %v163 = vunpack.c.l.b16 %v125
    %v164 = vunpack.c.l.b16 %v126
    %v165 = vunpack.c.l.b16 %v127
    %v166 = vunpack.c.l.b16 %v128
    %v167 = vunpack.c.l.b16 %v129
    %v168 = vunpack.c.l.b16 %v130
    %v169 = vunpack.c.l.b16 %v131
    %v170 = vunpack.c.l.b16 %v132
    %v171 = vunpack.c.l.b16 %v133
    %v172 = vunpack.c.l.b16 %v134
    %v173 = vunpack.c.l.b16 %v135
    %v174 = vpack.c.b16 %v159, %v158
    %v175 = vpack.c.b16 %v161, %v160
    %v176 = vpack.c.b16 %v163, %v162
    %v177 = vpack.c.b16 %v165, %v164
    %v178 = vpack.c.b16 %v167, %v166
    %v179 = vpack.c.b16 %v169, %v168
    %v180 = vpack.c.b16 %v171, %v170
    %v181 = vpack.c.b16 %v173, %v172
    %190 = vmatpush.bf16.msra.mxu0 %v181
    %191 = vmatpush.bf16.msra.mxu0 %v180
    %192 = vmatpush.bf16.msra.mxu0 %v179
    %193 = vmatpush.bf16.msra.mxu0 %v178
    %194 = vmatpush.bf16.msra.mxu0 %v177
    %195 = vmatpush.bf16.msra.mxu0 %v176
    %196 = vmatpush.bf16.msra.mxu0 %v175
    %197 = vmatpush.bf16.msra.mxu0 %v174
    %198 = vmatmul.bf16.gmra.mxu0 %v140
    %v199 = vpop.f32.mrf.mxu0
    %v200 = vadd.f32 0.0, %v199
    %v201 = vpop.f32.mrf.mxu0
    %v202 = vadd.f32 0.0, %v201
    %203 = vdwg.mxu0
    %v204 = vstv %s104
    %v205 = vmul.f32 %v204, %v200
    %v206 = vmul.f32 %v204, %v202
    %s207 = ssub.f32 1.0, %s104
    %v208 = vld [vmem:[#allocation9] sm:$0xf]
    %v209 = vld [vmem:[#allocation9 + $0x4] sm:$0xf]
    %v210 = vld [vmem:[#allocation9 + $0x8] sm:$0xf]
    %v211 = vld [vmem:[#allocation9 + $0xc] sm:$0xf]
    %v212 = vld [vmem:[#allocation9 + $0x10] sm:$0xf]
    %v213 = vld [vmem:[#allocation9 + $0x14] sm:$0xf]
    %v214 = vld [vmem:[#allocation9 + $0x18] sm:$0xf]
    %v215 = vld [vmem:[#allocation9 + $0x1c] sm:$0xf]
    %v216 = vld [vmem:[#allocation9 + $0x20] sm:$0xf]
    %v217 = vld [vmem:[#allocation9 + $0x24] sm:$0xf]
    %v218 = vld [vmem:[#allocation9 + $0x28] sm:$0xf]
    %v219 = vld [vmem:[#allocation9 + $0x2c] sm:$0xf]
    %v220 = vld [vmem:[#allocation9 + $0x30] sm:$0xf]
    %v221 = vld [vmem:[#allocation9 + $0x34] sm:$0xf]
    %v222 = vld [vmem:[#allocation9 + $0x38] sm:$0xf]
    %v223 = vld [vmem:[#allocation9 + $0x3c] sm:$0xf]
    %v240 = vunpack.c.l.b16 %v208
    %v241 = vunpack.c.l.b16 %v209
    %v242 = vunpack.c.l.b16 %v210
    %v243 = vunpack.c.l.b16 %v211
    %v244 = vunpack.c.l.b16 %v212
    %v245 = vunpack.c.l.b16 %v213
    %v246 = vunpack.c.l.b16 %v214
    %v247 = vunpack.c.l.b16 %v215
    %v248 = vunpack.c.l.b16 %v216
    %v249 = vunpack.c.l.b16 %v217
    %v250 = vunpack.c.l.b16 %v218
    %v251 = vunpack.c.l.b16 %v219
    %v252 = vunpack.c.l.b16 %v220
    %v253 = vunpack.c.l.b16 %v221
    %v254 = vunpack.c.l.b16 %v222
    %v255 = vunpack.c.l.b16 %v223
    %v256 = vpack.c.b16 %v241, %v240
    %v257 = vpack.c.b16 %v243, %v242
    %v258 = vpack.c.b16 %v245, %v244
    %v259 = vpack.c.b16 %v247, %v246
    %v260 = vpack.c.b16 %v249, %v248
    %v261 = vpack.c.b16 %v251, %v250
    %v262 = vpack.c.b16 %v253, %v252
    %v263 = vpack.c.b16 %v255, %v254
    %272 = vmatpush.bf16.msra.mxu0 %v263
    %273 = vmatpush.bf16.msra.mxu0 %v262
    %274 = vmatpush.bf16.msra.mxu0 %v261
    %275 = vmatpush.bf16.msra.mxu0 %v260
    %276 = vmatpush.bf16.msra.mxu0 %v259
    %277 = vmatpush.bf16.msra.mxu0 %v258
    %278 = vmatpush.bf16.msra.mxu0 %v257
    %279 = vmatpush.bf16.msra.mxu0 %v256
    %280 = vmatmul.bf16.gmra.mxu0 %v140
    %v281 = vpop.f32.mrf.mxu0
    %v282 = vadd.f32 0.0, %v281
    %v283 = vpop.f32.mrf.mxu0
    %v284 = vadd.f32 0.0, %v283
    %285 = vdwg.mxu0
    %v286 = vstv %s207
    %v287 = vmul.f32 %v286, %v282
    %v288 = vmul.f32 %v286, %v284
    %v289 = vadd.f32 %v205, %v287
    %v290 = vadd.f32 %v206, %v288
    %v291 = vadd.f32 %v118, %v289
    %v292 = vadd.f32 %v119, %v290
    %293 = vst [vmem:[#allocation2] sm:$0xff] %v291
    %294 = vst [vmem:[#allocation2 + $0x8] sm:$0xff] %v292
    // Predicated region
    $region38: #{tpu_custom_call.1} parent=1 // pred_check
      %p295 = pneg %p105
    $region39: #{tpu_custom_call.1} parent=1 // pred_check_branch
      %297 = sbr.rel (%p295) target = $region41
    $region40: #{tpu_custom_call.1} parent=1 // pred_region
      %v298 = vld [vmem:[%s97] sm:$0x1]
      %v299 = vunpack.c.l.bf16 %v298
      %v300 = vmul.f32 %v204, %v299
      %v301 = vld [vmem:[%s102] sm:$0x1]
      %v302 = vunpack.c.l.bf16 %v301
      %v303 = vmul.f32 %v286, %v302
      %v304 = vadd.f32 %v300, %v303
      %v305 = vld [vmem:[#allocation2] sm:$0xff]
      %v306 = vld [vmem:[#allocation2 + $0x8] sm:$0xff]
      %v307 = vperm.slane %v304, 0
      %v308 = vadd.f32 %v305, %v307
      %v309 = vadd.f32 %v306, %v307
      %310 = vst [vmem:[#allocation11] sm:$0xff] %v308
      %311 = vst [vmem:[#allocation11 + $0x8] sm:$0xff] %v309
    $region41: #{tpu_custom_call.1} parent=1 // pred_fallthru
      _
    // Predicated region
    $region42: #{tpu_custom_call.1} parent=1 // pred_check
      _
    $region43: #{tpu_custom_call.1} parent=1 // pred_check_branch
      %313 = sbr.rel (0) target = $region45
    $region44: #{tpu_custom_call.1} parent=1 // pred_region
      %315 = vsyncadd [#allocation8], 0
      %s316 = sshll.u32 [#allocation11], 4
      %s317 = int_to_ptr.vmem [resolvable:$true] %s316
      %s318 = sshll.u32 %s7, 4
      %s319 = int_to_ptr.hbm [resolvable:$true] %s318
      %324 = dma.vmem_to_hbm [thread:$0]  %s317, 256, %s319, [#allocation8], 128, 128, 8
    $region45: #{tpu_custom_call.1} parent=1 // pred_fallthru
      _
    // Predicated region
    $region46: #{tpu_custom_call.1} parent=1 // pred_check
      _
    $region47: #{tpu_custom_call.1} parent=1 // pred_check_branch
      %326 = sbr.rel (0) target = $region49
    $region48: #{tpu_custom_call.1} parent=1 // pred_region
      %328 = dma.done [#allocation8], 256
    $region49: #{tpu_custom_call.1} parent=1 // pred_fallthru
      _
    %329 = vsyncpa [#allocation7], 1
    %330 = vsyncpa [#allocation10], 1
    %331 = vsyncpa [#allocation8], 1

</llo_original>
